<compile_context>
chip_gen: v6e
topology: v6e:2x2x1
jax: 0.10.0
libtpu: 0.0.40
codegen_flags: <defaults>
</compile_context>

<pallas_src>
import jax
import jax.numpy as jnp
from jax.experimental import pallas as pl
from jax.experimental.pallas import tpu as pltpu


def hsigmoid_kernel(x_ref, o_ref):
    x = x_ref[...]
    # relu6(x + 3) / 6  == clamp(x + 3, 0, 6) * (1/6)
    o_ref[...] = (jnp.clip(x + 3.0, 0.0, 6.0) * (1.0 / 6.0)).astype(o_ref.dtype)


def _choose_layout(n: int, itemsize: int):
    """Pick (lane_width, block_rows, total_rows) for a flat element count."""
    LANE = 128
    # min sublane granule per dtype packing (f32: 8, bf16/f16: 16, int8/fp8: 32)
    sub = {4: 8, 2: 16, 1: 32}.get(itemsize, 8)

    # Wide lane dimension for large inputs (128 is the bare minimum, not the
    # sweet spot); keep it minimal for tiny inputs to avoid padding waste.
    if n >= (1 << 20):
        width = 1024
    elif n >= (1 << 16):
        width = 512
    else:
        width = LANE

    # Rows per block targeting ~2 MiB per step.
    target_block_bytes = 2 << 20
    block_rows = (target_block_bytes // (width * itemsize)) // sub * sub
    block_rows = max(sub, min(block_rows, 1024))

    # Never pick a block larger than the (sublane-rounded) data itself,
    # and round total rows up to a multiple of block_rows (no tile shrinking).
    rows_min = -(-n // width)                      # ceil(n / width)
    rows_min_aligned = -(-rows_min // sub) * sub   # round up to sublane granule
    block_rows = min(block_rows, rows_min_aligned)
    rows = -(-rows_min // block_rows) * block_rows
    return width, block_rows, rows


def hsigmoid(x: jax.Array) -> jax.Array:
    """Elementwise hard-sigmoid. Works on any shape / float dtype."""
    orig_shape = x.shape
    dtype = x.dtype
    n = x.size
    itemsize = jnp.dtype(dtype).itemsize

    width, block_rows, rows = _choose_layout(n, itemsize)
    n_pad = rows * width

    x_flat = x.reshape(-1)
    if n_pad != n:
        # Only pad when strictly needed (extra HBM pass otherwise avoided).
        x_flat = jnp.pad(x_flat, (0, n_pad - n))
    x2d = x_flat.reshape(rows, width)

    grid = (rows // block_rows,)

    out2d = pl.pallas_call(
        hsigmoid_kernel,
        out_shape=jax.ShapeDtypeStruct((rows, width), dtype),
        grid_spec=pltpu.PrefetchScalarGridSpec(
            num_scalar_prefetch=0,
            grid=grid,
            in_specs=[pl.BlockSpec((block_rows, width), lambda i: (i, 0))],
            out_specs=pl.BlockSpec((block_rows, width), lambda i: (i, 0)),
        ),
        compiler_params=pltpu.CompilerParams(
            dimension_semantics=("parallel",),       # megacore sharding on v7x
            vmem_limit_bytes=32 * 1024 * 1024,       # 4x ~2MiB block fits easily
        ),
    )(x2d)

    if n_pad != n:
        return out2d.reshape(-1)[:n].reshape(orig_shape)
    return out2d.reshape(orig_shape)


if __name__ == "__main__":
    key = jax.random.PRNGKey(0)
    x = jax.random.normal(key, (2, 4, 16, 16), dtype=jnp.float32) * 4.0

    y = hsigmoid(x)
    y = jax.block_until_ready(y)

    # reference check in plain JAX
    y_ref = jnp.clip(x + 3.0, 0.0, 6.0) / 6.0
    assert y.shape == x.shape and y.dtype == x.dtype
    assert jnp.max(jnp.abs(y - y_ref)) < 1e-6

    print("KERNEL_OK")
</pallas_src>

<mosaic_0001>
module attributes {stable_mosaic.version = 11 : i64} {
  func.func @hsigmoid_kernel(%arg0: i32, %arg1: memref<16x128xf32, #tpu.memory_space<vmem>>, %arg2: memref<16x128xf32, #tpu.memory_space<vmem>>) attributes {dimension_semantics = [#tpu.dimension_semantics<parallel>], iteration_bounds = array<i64: 1>, scalar_prefetch = 0 : i64, scratch_operands = 0 : i64, tpu.core_type = #tpu.core_type<tc>, window_params = [{transform_indices = @transform_0, window_bounds = array<i64: 16, 128>}, {transform_indices = @transform_1, window_bounds = array<i64: 16, 128>}]} {
    %c0 = arith.constant 0 : index
    %c0_0 = arith.constant 0 : index
    %0 = vector.load %arg1[%c0, %c0_0] : memref<16x128xf32, #tpu.memory_space<vmem>>, vector<16x128xf32>
    %cst = arith.constant 3.000000e+00 : f32
    %1 = vector.broadcast %cst : f32 to vector<16x128xf32>
    %2 = arith.addf %0, %1 : vector<16x128xf32>
    %cst_1 = arith.constant 0.000000e+00 : f32
    %cst_2 = arith.constant 6.000000e+00 : f32
    %3 = vector.broadcast %cst_1 : f32 to vector<16x128xf32>
    %4 = arith.maximumf %3, %2 : vector<16x128xf32>
    %5 = vector.broadcast %cst_2 : f32 to vector<16x128xf32>
    %6 = arith.minimumf %5, %4 : vector<16x128xf32>
    %cst_3 = arith.constant 0.166666672 : f32
    %7 = vector.broadcast %cst_3 : f32 to vector<16x128xf32>
    %8 = arith.mulf %6, %7 : vector<16x128xf32>
    %c0_4 = arith.constant 0 : index
    %c0_5 = arith.constant 0 : index
    %9 = vector.load %arg2[%c0_4, %c0_5] : memref<16x128xf32, #tpu.memory_space<vmem>>, vector<16x128xf32>
    tpu.vector_store %arg2[%c0_4, %c0_5], %8 {strides = array<i32>} : memref<16x128xf32, #tpu.memory_space<vmem>>, vector<16x128xf32>,
    return
  }
  func.func @transform_0(%arg0: i32) -> (i32, i32) {
    %c0_i32 = arith.constant 0 : i32
    %c0_i32_0 = arith.constant 0 : i32
    return %arg0, %c0_i32 : i32, i32
  }
  func.func @transform_1(%arg0: i32) -> (i32, i32) {
    %c0_i32 = arith.constant 0 : i32
    %c0_i32_0 = arith.constant 0 : i32
    return %arg0, %c0_i32 : i32, i32
  }
}

</mosaic_0001>

<llo_original>
// kernel: tpu_custom_call.1
$region0: #{tpu_custom_call.1}
  #allocation0 [shape = 'u32[]', space=smem, size = 0x4, offset = 0x4, fixed_abs, tag = 'smem constant byte address 0x4 - core index']
  #allocation1 [shape = 'u32[144,128]{1,0:T(1,128)}', space=vmem, size = 0x12000, scoped, tag = 'internal scratch']
  %s0 = inlined_call_operand.hbm [shape: f32[16,128], index: 0, kind: input, shape index: {}]
  %s1 = inlined_call_operand.hbm [shape: f32[16,128], index: 1, kind: output, shape index: {}]
  %s2 = sld [smem:[#allocation0]]
  $region18: #{tpu_custom_call.1} parent=0
    _
  %s4 = ssub.s32 1, %s2
  %s5 = scalar_select 0, %s4, %s2
  $region1: #{tpu_custom_call.1} parent=0
    #allocation2 [shape = 'u8[8192]{0}', space=vmem, size = 0x2000, scoped, tag = 'input window, operand 0, single buffered']
    #allocation3 [shape = 's32[1]{0}', space=sflag, size = 0x4, scoped, tag = 'scoped memory for tpu_custom_call.1']
    #allocation4 [shape = 's32[1]{0}', space=sflag, size = 0x4, scoped, tag = 'scoped memory for tpu_custom_call.1']
    #allocation5 [shape = 'u8[8192]{0}', space=vmem, size = 0x2000, scoped, tag = 'output window, operand 0, single buffered']
    %6 = vsyncpa [#allocation3], 0
    %7 = vsyncpa [#allocation4], 0
    // Predicated region
    $region2: #{tpu_custom_call.1} parent=1 // pred_check
      _
    $region3: #{tpu_custom_call.1} parent=1 // pred_check_branch
      %9 = sbr.rel (0) target = $region5
    $region4: #{tpu_custom_call.1} parent=1 // pred_region
      %s11 = ssub.s32 256, 256
      %12 = vsyncadd [#allocation3], %s11
      %s13 = sshll.u32 [#allocation2], 4
      %s14 = int_to_ptr.vmem [resolvable:$true] %s13
      %19 = dma.hbm_to_vmem [thread:$0]  %s0, 256, %s14, [#allocation3], 128, 128, 8
    $region5: #{tpu_custom_call.1} parent=1 // pred_fallthru
      _
    // Predicated region
    $region6: #{tpu_custom_call.1} parent=1 // pred_check
      _
    $region7: #{tpu_custom_call.1} parent=1 // pred_check_branch
      %21 = sbr.rel (0) target = $region9
    $region8: #{tpu_custom_call.1} parent=1 // pred_region
      %22 = dma.done [#allocation3], 256
    $region9: #{tpu_custom_call.1} parent=1 // pred_fallthru
      _
    %v23 = vld [vmem:[#allocation2] sm:$0xff]
    %v24 = vld [vmem:[#allocation2 + $0x8] sm:$0xff]
    %v25 = vadd.f32 %v23, 3.0
    %v26 = vadd.f32 %v24, 3.0
    %v27 = vmax.f32 %v25, 0.0
    %v28 = vmax.f32 %v26, 0.0
    %v29 = vmin.f32 %v27, 6.0
    %v30 = vmin.f32 %v28, 6.0
    %v31 = vmul.f32 %v29, 0.16666667
    %v32 = vmul.f32 %v30, 0.16666667
    %33 = vst [vmem:[#allocation5] sm:$0xff] %v31
    %34 = vst [vmem:[#allocation5 + $0x8] sm:$0xff] %v32
    // Predicated region
    $region10: #{tpu_custom_call.1} parent=1 // pred_check
      _
    $region11: #{tpu_custom_call.1} parent=1 // pred_check_branch
      %36 = sbr.rel (0) target = $region13
    $region12: #{tpu_custom_call.1} parent=1 // pred_region
      %s38 = ssub.s32 256, 256
      %39 = vsyncadd [#allocation4], %s38
      %s40 = sshll.u32 [#allocation5], 4
      %s41 = int_to_ptr.vmem [resolvable:$true] %s40
      %46 = dma.vmem_to_hbm [thread:$0]  %s41, 256, %s1, [#allocation4], 128, 128, 8
    $region13: #{tpu_custom_call.1} parent=1 // pred_fallthru
      _
    // Predicated region
    $region14: #{tpu_custom_call.1} parent=1 // pred_check
      _
    $region15: #{tpu_custom_call.1} parent=1 // pred_check_branch
      %48 = sbr.rel (0) target = $region17
    $region16: #{tpu_custom_call.1} parent=1 // pred_region
      %49 = dma.done [#allocation4], 256
    $region17: #{tpu_custom_call.1} parent=1 // pred_fallthru
      _
    %50 = vsyncpa [#allocation3], 1
    %51 = vsyncpa [#allocation4], 1

</llo_original>
